<compile_context>
chip_gen: v6e
topology: v6e:2x2x1
jax: 0.10.0
libtpu: 0.0.40
codegen_flags: <defaults>
</compile_context>

<pallas_src>
import jax
import jax.numpy as jnp
from jax.experimental import pallas as pl
from jax.experimental.pallas import tpu as pltpu


def _linear_add_relu_kernel(x_ref, w_ref, b_ref, other_ref, o_ref):
    # All refs are SMEM:
    #   x_ref:     (1, K) f32
    #   w_ref:     (1, K) f32   (Linear weight, shape (out=1, in=K))
    #   b_ref:     (1,)   f32   (Linear bias)
    #   other_ref: (1, 1) f32
    #   o_ref:     (1, 1) f32   (output)
    # K = 8 multiply-accumulates on the scalar ALU; bias + other added in the
    # same scalar chain (rides the free scalar slot).  No vector loads, no
    # masked vst, no VMEM traffic at all.
    k_dim = x_ref.shape[1]
    acc = b_ref[0] + other_ref[0, 0]
    for k in range(k_dim):  # static K=8 -> fully unrolled at trace time
        acc = acc + x_ref[0, k] * w_ref[0, k]
    o_ref[0, 0] = jnp.maximum(acc, 0.0).astype(o_ref.dtype)


def linear_add_relu(x, w, b, other):
    B, K = x.shape
    N = w.shape[0]
    # Scalar-unit path is only valid for the module's shapes: batch 1, one
    # output feature, scalar `other`.  (For broadcast `other` of shape (B, N)
    # or B > 1, a lane-dense vector layout would be needed instead.)
    assert B == 1 and N == 1, "scalar kernel path assumes (1, K) x (K, 1)"
    assert other.size == 1, "scalar kernel path assumes scalar `other`"

    cost = pl.CostEstimate(
        flops=2 * B * K * N + 2 * B * N,
        transcendentals=0,
        bytes_accessed=(B * K + N * K + N + other.size + B * N) * 4,
    )

    return pl.pallas_call(
        _linear_add_relu_kernel,
        out_shape=jax.ShapeDtypeStruct((B, N), x.dtype),
        in_specs=[
            pl.BlockSpec(memory_space=pltpu.MemorySpace.SMEM),  # x     (1, K)
            pl.BlockSpec(memory_space=pltpu.MemorySpace.SMEM),  # w     (1, K)
            pl.BlockSpec(memory_space=pltpu.MemorySpace.SMEM),  # bias  (1,)
            pl.BlockSpec(memory_space=pltpu.MemorySpace.SMEM),  # other (1, 1)
        ],
        out_specs=pl.BlockSpec(memory_space=pltpu.MemorySpace.SMEM),
        cost_estimate=cost,
    )(x, w, b, other)


if __name__ == "__main__":
    key = jax.random.PRNGKey(0)
    kx, kw, kb, ko = jax.random.split(key, 4)

    # Deterministic "parameters" (Linear(8, 1)) and inputs, matching the spec.
    x3 = jax.random.normal(kx, (1, 8), dtype=jnp.float32)
    weight = jax.random.normal(kw, (1, 8), dtype=jnp.float32) * 0.3
    bias = jax.random.normal(kb, (1,), dtype=jnp.float32) * 0.1
    other = jax.random.normal(ko, (1, 1), dtype=jnp.float32)

    out = jax.block_until_ready(linear_add_relu(x3, weight, bias, other))

    # Reference check in plain JAX.
    ref = jnp.maximum(x3 @ weight.T + bias + other, 0.0)
    assert out.shape == (1, 1)
    assert out.dtype == x3.dtype
    assert jnp.allclose(out, ref, atol=1e-5, rtol=1e-5)

    print("KERNEL_OK")
</pallas_src>

<mosaic_0001>
module attributes {stable_mosaic.version = 11 : i64} {
  func.func @_linear_add_relu_kernel(%arg0: memref<1x8xf32, #tpu.memory_space<smem>>, %arg1: memref<1x8xf32, #tpu.memory_space<smem>>, %arg2: memref<1xf32, #tpu.memory_space<smem>>, %arg3: memref<1x1xf32, #tpu.memory_space<smem>>, %arg4: memref<1x1xf32, #tpu.memory_space<smem>>) attributes {dimension_semantics = [], scalar_prefetch = 0 : i64, scratch_operands = 0 : i64, tpu.core_type = #tpu.core_type<tc>} {
    %c0 = arith.constant 0 : index
    %0 = memref.load %arg2[%c0] : memref<1xf32, #tpu.memory_space<smem>>
    %c0_0 = arith.constant 0 : index
    %c0_1 = arith.constant 0 : index
    %1 = memref.load %arg3[%c0_0, %c0_1] : memref<1x1xf32, #tpu.memory_space<smem>>
    %2 = arith.addf %0, %1 : f32
    %c0_2 = arith.constant 0 : index
    %c0_3 = arith.constant 0 : index
    %3 = memref.load %arg0[%c0_2, %c0_3] : memref<1x8xf32, #tpu.memory_space<smem>>
    %c0_4 = arith.constant 0 : index
    %c0_5 = arith.constant 0 : index
    %4 = memref.load %arg1[%c0_4, %c0_5] : memref<1x8xf32, #tpu.memory_space<smem>>
    %5 = arith.mulf %3, %4 : f32
    %6 = arith.addf %2, %5 : f32
    %c0_6 = arith.constant 0 : index
    %c1 = arith.constant 1 : index
    %7 = memref.load %arg0[%c0_6, %c1] : memref<1x8xf32, #tpu.memory_space<smem>>
    %c0_7 = arith.constant 0 : index
    %c1_8 = arith.constant 1 : index
    %8 = memref.load %arg1[%c0_7, %c1_8] : memref<1x8xf32, #tpu.memory_space<smem>>
    %9 = arith.mulf %7, %8 : f32
    %10 = arith.addf %6, %9 : f32
    %c0_9 = arith.constant 0 : index
    %c2 = arith.constant 2 : index
    %11 = memref.load %arg0[%c0_9, %c2] : memref<1x8xf32, #tpu.memory_space<smem>>
    %c0_10 = arith.constant 0 : index
    %c2_11 = arith.constant 2 : index
    %12 = memref.load %arg1[%c0_10, %c2_11] : memref<1x8xf32, #tpu.memory_space<smem>>
    %13 = arith.mulf %11, %12 : f32
    %14 = arith.addf %10, %13 : f32
    %c0_12 = arith.constant 0 : index
    %c3 = arith.constant 3 : index
    %15 = memref.load %arg0[%c0_12, %c3] : memref<1x8xf32, #tpu.memory_space<smem>>
    %c0_13 = arith.constant 0 : index
    %c3_14 = arith.constant 3 : index
    %16 = memref.load %arg1[%c0_13, %c3_14] : memref<1x8xf32, #tpu.memory_space<smem>>
    %17 = arith.mulf %15, %16 : f32
    %18 = arith.addf %14, %17 : f32
    %c0_15 = arith.constant 0 : index
    %c4 = arith.constant 4 : index
    %19 = memref.load %arg0[%c0_15, %c4] : memref<1x8xf32, #tpu.memory_space<smem>>
    %c0_16 = arith.constant 0 : index
    %c4_17 = arith.constant 4 : index
    %20 = memref.load %arg1[%c0_16, %c4_17] : memref<1x8xf32, #tpu.memory_space<smem>>
    %21 = arith.mulf %19, %20 : f32
    %22 = arith.addf %18, %21 : f32
    %c0_18 = arith.constant 0 : index
    %c5 = arith.constant 5 : index
    %23 = memref.load %arg0[%c0_18, %c5] : memref<1x8xf32, #tpu.memory_space<smem>>
    %c0_19 = arith.constant 0 : index
    %c5_20 = arith.constant 5 : index
    %24 = memref.load %arg1[%c0_19, %c5_20] : memref<1x8xf32, #tpu.memory_space<smem>>
    %25 = arith.mulf %23, %24 : f32
    %26 = arith.addf %22, %25 : f32
    %c0_21 = arith.constant 0 : index
    %c6 = arith.constant 6 : index
    %27 = memref.load %arg0[%c0_21, %c6] : memref<1x8xf32, #tpu.memory_space<smem>>
    %c0_22 = arith.constant 0 : index
    %c6_23 = arith.constant 6 : index
    %28 = memref.load %arg1[%c0_22, %c6_23] : memref<1x8xf32, #tpu.memory_space<smem>>
    %29 = arith.mulf %27, %28 : f32
    %30 = arith.addf %26, %29 : f32
    %c0_24 = arith.constant 0 : index
    %c7 = arith.constant 7 : index
    %31 = memref.load %arg0[%c0_24, %c7] : memref<1x8xf32, #tpu.memory_space<smem>>
    %c0_25 = arith.constant 0 : index
    %c7_26 = arith.constant 7 : index
    %32 = memref.load %arg1[%c0_25, %c7_26] : memref<1x8xf32, #tpu.memory_space<smem>>
    %33 = arith.mulf %31, %32 : f32
    %34 = arith.addf %30, %33 : f32
    %cst = arith.constant 0.000000e+00 : f32
    %35 = arith.maximumf %34, %cst : f32
    %c0_27 = arith.constant 0 : index
    %c0_28 = arith.constant 0 : index
    %36 = memref.load %arg4[%c0_27, %c0_28] : memref<1x1xf32, #tpu.memory_space<smem>>
    memref.store %35, %arg4[%c0_27, %c0_28] : memref<1x1xf32, #tpu.memory_space<smem>>
    return
  }
}

</mosaic_0001>

<llo_original>
// kernel: tpu_custom_call.1
$region0: #{tpu_custom_call.1}
  #allocation0 [shape = 'u32[]', space=smem, size = 0x4, offset = 0x4, fixed_abs, tag = 'smem constant byte address 0x4 - core index']
  #allocation1 [shape = 'u32[144,128]{1,0:T(1,128)}', space=vmem, size = 0x12000, scoped, tag = 'internal scratch']
  #allocation2 [shape = 'f32[1]{0:T(128)S(6)}', space=smem, size = 0x200, scoped, tag = 'scoped memory for tpu_custom_call.1']
  #allocation3 [shape = 'f32[1,1]{1,0:T(1,128)S(6)}', space=smem, size = 0x200, scoped, tag = 'scoped memory for tpu_custom_call.1']
  %s0 = inlined_call_operand.vmem [shape: f32[1,8], index: 0, kind: input, shape index: {}]
  %s1 = inlined_call_operand.vmem [shape: f32[1,8], index: 1, kind: input, shape index: {}]
  %s2 = inlined_call_operand.<no memory space> [shape: f32[1], index: 2, kind: input, shape index: {}]
  %s3 = inlined_call_operand.<no memory space> [shape: f32[1,1], index: 3, kind: input, shape index: {}]
  %s4 = inlined_call_operand.hbm [shape: f32[1,1], index: 4, kind: output, shape index: {}]
  %s5 = sld [smem:[#allocation0]]
  $region34: #{tpu_custom_call.1} parent=0
    _
  %s7 = ssub.s32 1, %s5
  %s8 = scalar_select 0, %s7, %s5
  %9 = sst [smem:[#allocation2]] %s2
  %10 = sst [smem:[#allocation3]] %s3
  $region1: #{tpu_custom_call.1} parent=0
    #allocation4 [shape = 'u8[512]{0}', space=smem, size = 0x200, scoped, tag = 'input window, operand 0, single buffered']
    #allocation5 [shape = 's32[1]{0}', space=sflag, size = 0x4, scoped, tag = 'scoped memory for tpu_custom_call.1']
    #allocation6 [shape = 's32[1]{0}', space=sflag, size = 0x4, scoped, tag = 'scoped memory for tpu_custom_call.1']
    #allocation7 [shape = 'u8[512]{0}', space=smem, size = 0x200, scoped, tag = 'input window, operand 1, single buffered']
    #allocation8 [shape = 's32[1]{0}', space=sflag, size = 0x4, scoped, tag = 'scoped memory for tpu_custom_call.1']
    #allocation9 [shape = 'u8[512]{0}', space=smem, size = 0x200, scoped, tag = 'output window, operand 0, single buffered']
    %11 = vsyncpa [#allocation6], 0
    %12 = vsyncpa [#allocation8], 0
    %13 = vsyncpa [#allocation5], 0
    // Predicated region
    $region2: #{tpu_custom_call.1} parent=1 // pred_check
      _
    $region3: #{tpu_custom_call.1} parent=1 // pred_check_branch
      %15 = sbr.rel (0) target = $region5
    $region4: #{tpu_custom_call.1} parent=1 // pred_region
      %s17 = ssub.s32 16, 16
      %18 = vsyncadd [#allocation6], %s17
      %s20 = sshll.u32 %s0, 4
      %s21 = int_to_ptr.vmem [resolvable:$true] %s20
      %23 = dma.vmem_to_smem %s21, 16, [#allocation4], [#allocation6]
    $region5: #{tpu_custom_call.1} parent=1 // pred_fallthru
      _
    // Predicated region
    $region6: #{tpu_custom_call.1} parent=1 // pred_check
      _
    $region7: #{tpu_custom_call.1} parent=1 // pred_check_branch
      %25 = sbr.rel (0) target = $region9
    $region8: #{tpu_custom_call.1} parent=1 // pred_region
      %s27 = ssub.s32 16, 16
      %28 = vsyncadd [#allocation8], %s27
      %s30 = sshll.u32 %s1, 4
      %s31 = int_to_ptr.vmem [resolvable:$true] %s30
      %33 = dma.vmem_to_smem %s31, 16, [#allocation7], [#allocation8]
    $region9: #{tpu_custom_call.1} parent=1 // pred_fallthru
      _
    // Predicated region
    $region10: #{tpu_custom_call.1} parent=1 // pred_check
      _
    $region11: #{tpu_custom_call.1} parent=1 // pred_check_branch
      %35 = sbr.rel (0) target = $region13
    $region12: #{tpu_custom_call.1} parent=1 // pred_region
      _
    $region13: #{tpu_custom_call.1} parent=1 // pred_fallthru
      _
    // Predicated region
    $region14: #{tpu_custom_call.1} parent=1 // pred_check
      _
    $region15: #{tpu_custom_call.1} parent=1 // pred_check_branch
      %37 = sbr.rel (0) target = $region17
    $region16: #{tpu_custom_call.1} parent=1 // pred_region
      _
    $region17: #{tpu_custom_call.1} parent=1 // pred_fallthru
      _
    // Predicated region
    $region18: #{tpu_custom_call.1} parent=1 // pred_check
      _
    $region19: #{tpu_custom_call.1} parent=1 // pred_check_branch
      %39 = sbr.rel (0) target = $region21
    $region20: #{tpu_custom_call.1} parent=1 // pred_region
      %40 = dma.done [#allocation6], 16
    $region21: #{tpu_custom_call.1} parent=1 // pred_fallthru
      _
    // Predicated region
    $region22: #{tpu_custom_call.1} parent=1 // pred_check
      _
    $region23: #{tpu_custom_call.1} parent=1 // pred_check_branch
      %42 = sbr.rel (0) target = $region25
    $region24: #{tpu_custom_call.1} parent=1 // pred_region
      %43 = dma.done [#allocation8], 16
    $region25: #{tpu_custom_call.1} parent=1 // pred_fallthru
      _
    %44 = sfence
    %s45 = sld [smem:[#allocation2]]
    %s46 = sld [smem:[#allocation3]]
    %s47 = sadd.f32 %s45, %s46
    %s48 = sld [smem:[#allocation4]]
    %s49 = sld [smem:[#allocation7]]
    %s50 = smul.f32 %s48, %s49
    %s51 = sadd.f32 %s47, %s50
    %s52 = sld [smem:[#allocation4 + $0x1]]
    %s53 = sld [smem:[#allocation7 + $0x1]]
    %s54 = smul.f32 %s52, %s53
    %s55 = sadd.f32 %s51, %s54
    %s56 = sld [smem:[#allocation4 + $0x2]]
    %s57 = sld [smem:[#allocation7 + $0x2]]
    %s58 = smul.f32 %s56, %s57
    %s59 = sadd.f32 %s55, %s58
    %s60 = sld [smem:[#allocation4 + $0x3]]
    %s61 = sld [smem:[#allocation7 + $0x3]]
    %s62 = smul.f32 %s60, %s61
    %s63 = sadd.f32 %s59, %s62
    %s64 = sld [smem:[#allocation4 + $0x4]]
    %s65 = sld [smem:[#allocation7 + $0x4]]
    %s66 = smul.f32 %s64, %s65
    %s67 = sadd.f32 %s63, %s66
    %s68 = sld [smem:[#allocation4 + $0x5]]
    %s69 = sld [smem:[#allocation7 + $0x5]]
    %s70 = smul.f32 %s68, %s69
    %s71 = sadd.f32 %s67, %s70
    %s72 = sld [smem:[#allocation4 + $0x6]]
    %s73 = sld [smem:[#allocation7 + $0x6]]
    %s74 = smul.f32 %s72, %s73
    %s75 = sadd.f32 %s71, %s74
    %s76 = sld [smem:[#allocation4 + $0x7]]
    %s77 = sld [smem:[#allocation7 + $0x7]]
    %s78 = smul.f32 %s76, %s77
    %s79 = sadd.f32 %s75, %s78
    %s80 = smax.f32 %s79, 0.0
    %s81 = scalar_lea.smem [#allocation9], 0
    %82 = sst [smem:[%s81]] %s80
    // Predicated region
    $region26: #{tpu_custom_call.1} parent=1 // pred_check
      _
    $region27: #{tpu_custom_call.1} parent=1 // pred_check_branch
      %84 = sbr.rel (0) target = $region29
    $region28: #{tpu_custom_call.1} parent=1 // pred_region
      %s86 = ssub.s32 16, 16
      %87 = vsyncadd [#allocation5], %s86
      %90 = dma.smem_to_hbm [#allocation9], 16, %s4, [#allocation5]
    $region29: #{tpu_custom_call.1} parent=1 // pred_fallthru
      _
    // Predicated region
    $region30: #{tpu_custom_call.1} parent=1 // pred_check
      _
    $region31: #{tpu_custom_call.1} parent=1 // pred_check_branch
      %92 = sbr.rel (0) target = $region33
    $region32: #{tpu_custom_call.1} parent=1 // pred_region
      %93 = dma.done [#allocation5], 16
    $region33: #{tpu_custom_call.1} parent=1 // pred_fallthru
      _
    %94 = sfence
    %95 = vsyncpa [#allocation5], 1
    %96 = vsyncpa [#allocation6], 1
    %97 = vsyncpa [#allocation8], 1

</llo_original>
